<compile_context>
chip_gen: v5e
topology: v5e:2x2
jax: 0.10.0
libtpu: 0.0.40
codegen_flags: <defaults>
</compile_context>

<pallas_src>
from typing import NamedTuple

import jax
import jax.numpy as jnp
from jax.experimental import pallas as pl
from jax.experimental.pallas import tpu as pltpu


# ----------------------------- helpers --------------------------------------


def _round_up(x, m):
    return (x + m - 1) // m * m


def _vmem_capacity_bytes():
    try:
        cap = int(getattr(pltpu.get_tpu_info(), "vmem_capacity_bytes", 0))
        if cap > 0:
            return cap
    except Exception:
        pass
    return 64 * 1024 * 1024  # conservative: v7x per-TC VMEM


def _largest_tile(total, cap, step=128):
    """Largest multiple of `step` that divides `total` (itself a multiple of
    `step`) and is <= max(step, min(total, cap))."""
    cap = max(step, min(total, cap))
    t = (cap // step) * step
    while total % t:
        t -= step
    return t


def _vmem_bytes(tm, tn, tk, out_itemsize, multi_k):
    b = 2 * (tm * tk * 2)                # x blocks (double-buffered, bf16)
    b += 2 * (tk * tn * 2)               # w blocks (bf16)
    b += 2 * (tn * 4)                    # bias blocks (f32)
    b += 2 * (tm * tn * out_itemsize)    # out blocks
    if multi_k:
        b += tm * tn * 4                 # f32 accumulator scratch
    return b


def _select_tiles(B, kp, nf, out_itemsize, budget):
    """Grow tiles as large as the VMEM budget allows; prefer full-K (single
    K step) and full-N (weight resident) tiles."""
    tm = min(512, _round_up(B, 8))
    tk = _largest_tile(kp, 4096)
    tn = _largest_tile(nf, 2048)

    def est():
        return _vmem_bytes(tm, tn, tk, out_itemsize, tk < kp)

    while est() > budget:
        if tn > 512:
            tn = _largest_tile(nf, tn // 2)
        elif tk > 1024:
            tk = _largest_tile(kp, tk // 2)
        elif tm > 128:
            tm = max(8, _round_up(tm // 2, 8))
        elif tn > 128:
            tn = _largest_tile(nf, tn // 2)
        elif tk > 128:
            tk = _largest_tile(kp, tk // 2)
        elif tm > 8:
            tm = max(8, _round_up(tm // 2, 8))
        else:
            break
    return tm, tn, tk


# ----------------------------- parameters -----------------------------------


class LinearMagPhaseParams(NamedTuple):
    w: jax.Array      # [2, Kp, Np] bf16, K/N zero-padded to multiples of 128
    b: jax.Array      # [2, 1,  Np] f32,  N zero-padded
    fin: int
    fout: int


def prepare_params(w, b):
    """One-time prep (call at model init, reuse every forward): cast the two
    Linear weights to bf16 / bias to f32 and zero-pad K,N to multiples of 128.
    w: [2, F_in, F_out] (in x out layout), b: [2, F_out]."""
    two, fin, fout = w.shape
    assert two == 2 and b.shape == (2, fout)
    kp, np_ = _round_up(fin, 128), _round_up(fout, 128)
    wb = w.astype(jnp.bfloat16)
    if (kp, np_) != (fin, fout):
        wb = jnp.pad(wb, ((0, 0), (0, kp - fin), (0, np_ - fout)))
    bf = b.astype(jnp.float32)[:, None, :]
    if np_ != fout:
        bf = jnp.pad(bf, ((0, 0), (0, 0), (0, np_ - fout)))
    return LinearMagPhaseParams(w=wb, b=bf, fin=fin, fout=fout)


# ----------------------------- kernels --------------------------------------


def _direct_kernel(x_ref, w_ref, b_ref, o_ref):
    # Single K step: relu(x @ W + b) straight to the output block -- no f32
    # accumulator scratch, no branches.
    y = jnp.dot(x_ref[...], w_ref[...], preferred_element_type=jnp.float32)
    o_ref[...] = jnp.maximum(y + b_ref[...], 0.0).astype(o_ref.dtype)


def _acc_kernel(x_ref, w_ref, b_ref, o_ref, acc_ref):
    # Multi K step: f32 VMEM accumulator, bias + CReLU only in the finalize.
    k = pl.program_id(3)

    @pl.when(k == 0)
    def _():
        acc_ref[...] = jnp.zeros_like(acc_ref)

    acc_ref[...] += jnp.dot(x_ref[...], w_ref[...],
                            preferred_element_type=jnp.float32)

    @pl.when(k == pl.num_programs(3) - 1)
    def _():
        o_ref[...] = jnp.maximum(acc_ref[...] + b_ref[...],
                                 0.0).astype(o_ref.dtype)


# ----------------------------- forward --------------------------------------


def linear_magphase_block(x, params, *, out_dtype=None, tm=None, tn=None, tk=None):
    """LinearMagPhaseBlock forward: x [2, B, F_in] -> [2, B, F_out].
    `params` comes from prepare_params() (persisted bf16 weights)."""
    two, B, fin = x.shape
    assert two == 2 and fin == params.fin
    kp, nf = params.w.shape[1], params.w.shape[2]
    fout = params.fout
    out_dtype = jnp.dtype(out_dtype if out_dtype is not None else x.dtype)

    # Per-call activation prep: bf16 cast (skipped if x is already bf16); K is
    # zero-padded only when F_in is not lane-aligned (required for a correct
    # reduction).  M/N raggedness uses partial edge blocks -- no pads/slices.
    xb = x if x.dtype == jnp.bfloat16 else x.astype(jnp.bfloat16)
    if kp != fin:
        xb = jnp.pad(xb, ((0, 0), (0, 0), (0, kp - fin)))

    cap = _vmem_capacity_bytes()
    a_tm, a_tn, a_tk = _select_tiles(B, kp, nf, out_dtype.itemsize,
                                     budget=int(0.55 * cap))
    tm = a_tm if tm is None else min(tm, _round_up(B, 8))
    tn = a_tn if tn is None else tn
    tk = a_tk if tk is None else tk
    assert tm % 8 == 0
    assert nf % tn == 0 and tn % 128 == 0, "tn must divide padded F_out"
    assert kp % tk == 0 and tk % 128 == 0, "tk must divide padded F_in"

    grid_m = pl.cdiv(B, tm)
    grid_n = nf // tn
    grid_k = kp // tk
    multi_k = grid_k > 1

    vmem_est = _vmem_bytes(tm, tn, tk, out_dtype.itemsize, multi_k)
    vmem_limit = int(min(max(2 * vmem_est + (4 << 20), 16 << 20),
                         int(0.75 * cap)))

    # HBM traffic estimate including re-streaming (x reused across the j sweep;
    # W resident across i when it is a single (c, ., .) block).
    w_passes = 1 if (not multi_k and grid_n == 1) else grid_m
    x_passes = grid_n if multi_k else 1
    cost = pl.CostEstimate(
        flops=2 * 2 * B * kp * nf,
        transcendentals=0,
        bytes_accessed=int(xb.size * 2 * x_passes
                           + params.w.size * 2 * w_passes
                           + params.b.size * 4
                           + 2 * B * fout * out_dtype.itemsize),
    )

    out_shape = jax.ShapeDtypeStruct((2, B, fout), out_dtype)

    if multi_k:
        grid_spec = pltpu.PrefetchScalarGridSpec(
            num_scalar_prefetch=0,
            grid=(2, grid_m, grid_n, grid_k),
            in_specs=[
                pl.BlockSpec((pl.Squeezed(), tm, tk), lambda c, i, j, k: (c, i, k)),
                pl.BlockSpec((pl.Squeezed(), tk, tn), lambda c, i, j, k: (c, k, j)),
                pl.BlockSpec((pl.Squeezed(), 1, tn), lambda c, i, j, k: (c, 0, j)),
            ],
            out_specs=pl.BlockSpec((pl.Squeezed(), tm, tn),
                                   lambda c, i, j, k: (c, i, j)),
            scratch_shapes=[pltpu.VMEM((tm, tn), jnp.float32)],
        )
        dims = ("parallel", "parallel", "parallel", "arbitrary")
        kernel = _acc_kernel
    else:
        grid_spec = pltpu.PrefetchScalarGridSpec(
            num_scalar_prefetch=0,
            grid=(2, grid_m, grid_n),
            in_specs=[
                pl.BlockSpec((pl.Squeezed(), tm, tk), lambda c, i, j: (c, i, 0)),
                pl.BlockSpec((pl.Squeezed(), tk, tn), lambda c, i, j: (c, 0, j)),
                pl.BlockSpec((pl.Squeezed(), 1, tn), lambda c, i, j: (c, 0, j)),
            ],
            out_specs=pl.BlockSpec((pl.Squeezed(), tm, tn),
                                   lambda c, i, j: (c, i, j)),
            scratch_shapes=[],
        )
        dims = ("parallel", "parallel", "parallel")
        kernel = _direct_kernel

    return pl.pallas_call(
        kernel,
        out_shape=out_shape,
        grid_spec=grid_spec,
        compiler_params=pltpu.CompilerParams(
            dimension_semantics=dims,
            vmem_limit_bytes=vmem_limit,
        ),
        cost_estimate=cost,
    )(xb, params.w, params.b)


# ----------------------------- reference & demo ------------------------------


def init_params_torch_style(key, fcn, dtype=jnp.float32):
    """nn.Linear init: U(-1/sqrt(fan_in), 1/sqrt(fan_in)); weights stored (in, out)."""
    k_wm, k_wp, k_bm, k_bp = jax.random.split(key, 4)
    bound = 1.0 / (fcn ** 0.5)
    w_mag = jax.random.uniform(k_wm, (fcn, fcn), dtype, -bound, bound)
    w_pha = jax.random.uniform(k_wp, (fcn, fcn), dtype, -bound, bound)
    b_mag = jax.random.uniform(k_bm, (fcn,), dtype, -bound, bound)
    b_pha = jax.random.uniform(k_bp, (fcn,), dtype, -bound, bound)
    w = jnp.stack([w_mag, w_pha], axis=0)      # [2, F_in, F_out]
    b = jnp.stack([b_mag, b_pha], axis=0)      # [2, F_out]
    return w, b


def reference(x, w, b):
    # Plain-JAX reference on the same bf16-rounded operands the kernel feeds the MXU.
    xf = x.astype(jnp.bfloat16).astype(jnp.float32)
    wf = w.astype(jnp.bfloat16).astype(jnp.float32)
    y = jnp.einsum("cbi,cio->cbo", xf, wf,
                   precision=jax.lax.Precision.HIGHEST)
    y = y + b[:, None, :].astype(jnp.float32)
    return jnp.maximum(y, 0.0).astype(x.dtype)


if __name__ == "__main__":
    key = jax.random.PRNGKey(0)

    # Case 1: lane-aligned shapes -> single-K direct kernel, whole per-component
    # W resident in VMEM, grid = (2, 1, 1).
    B, fcn = 128, 256
    k_x, k_p, key = jax.random.split(key, 3)
    x = jax.random.normal(k_x, (2, B, fcn), dtype=jnp.float32)
    w, b = init_params_torch_style(k_p, fcn)
    params = prepare_params(w, b)              # one-time bf16 cast + pad
    out = jax.block_until_ready(linear_magphase_block(x, params))
    ref = reference(x, w, b)
    assert out.shape == (2, B, fcn)
    assert jnp.allclose(out, ref, atol=2e-3, rtol=2e-3), "mismatch (case 1)"

    # Case 2: non-lane-aligned features + ragged batch -> exercises the one-time
    # K/N weight pad, the per-call K pad of x, and masked M/N edge stores
    # (no padded output / no output slice).
    B2, fcn2 = 125, 192
    k_x2, k_p2, key = jax.random.split(key, 3)
    x2 = jax.random.normal(k_x2, (2, B2, fcn2), dtype=jnp.float32)
    w2, b2 = init_params_torch_style(k_p2, fcn2)
    params2 = prepare_params(w2, b2)
    out2 = jax.block_until_ready(linear_magphase_block(x2, params2))
    ref2 = reference(x2, w2, b2)
    assert out2.shape == (2, B2, fcn2)
    assert jnp.allclose(out2, ref2, atol=2e-3, rtol=2e-3), "mismatch (case 2)"

    # Case 3: forced small tk/tn -> exercises the multi-K accumulator path.
    out3 = jax.block_until_ready(
        linear_magphase_block(x, params, tk=128, tn=128))
    assert out3.shape == (2, B, fcn)
    assert jnp.allclose(out3, ref, atol=2e-3, rtol=2e-3), "mismatch (case 3)"

    print("KERNEL_OK")
</pallas_src>

<mosaic_0001>
module attributes {stable_mosaic.version = 11 : i64} {
  func.func @_direct_kernel(%arg0: i32, %arg1: i32, %arg2: i32, %arg3: memref<1x128x256xbf16, #tpu.memory_space<vmem>>, %arg4: memref<1x256x256xbf16, #tpu.memory_space<vmem>>, %arg5: memref<1x1x256xf32, #tpu.memory_space<vmem>>, %arg6: memref<1x128x256xf32, #tpu.memory_space<vmem>>) attributes {dimension_semantics = [#tpu.dimension_semantics<parallel>, #tpu.dimension_semantics<parallel>, #tpu.dimension_semantics<parallel>], iteration_bounds = array<i64: 2, 1, 1>, scalar_prefetch = 0 : i64, scratch_operands = 0 : i64, tpu.core_type = #tpu.core_type<tc>, window_params = [{transform_indices = @transform_0, window_bounds = array<i64: 1, 128, 256>}, {transform_indices = @transform_1, window_bounds = array<i64: 1, 256, 256>}, {transform_indices = @transform_2, window_bounds = array<i64: 1, 1, 256>}, {transform_indices = @transform_3, window_bounds = array<i64: 1, 128, 256>}]} {
    %c0 = arith.constant 0 : index
    %c0_0 = arith.constant 0 : index
    %c0_1 = arith.constant 0 : index
    %0 = vector.load %arg3[%c0, %c0_0, %c0_1] : memref<1x128x256xbf16, #tpu.memory_space<vmem>>, vector<1x128x256xbf16>
    %1 = vector.shape_cast %0 : vector<1x128x256xbf16> to vector<128x256xbf16>
    %c0_2 = arith.constant 0 : index
    %c0_3 = arith.constant 0 : index
    %c0_4 = arith.constant 0 : index
    %2 = vector.load %arg4[%c0_2, %c0_3, %c0_4] : memref<1x256x256xbf16, #tpu.memory_space<vmem>>, vector<1x256x256xbf16>
    %3 = vector.shape_cast %2 : vector<1x256x256xbf16> to vector<256x256xbf16>
    %cst = arith.constant dense<0.000000e+00> : vector<128x256xf32>
    %4 = tpu.matmul %1, %3, %cst {dimension_numbers = #tpu.dot_dimension_numbers<[1], [0], [0], [1], [0, 0, 1, 1], [], []>} : vector<128x256xbf16>, vector<256x256xbf16>, vector<128x256xf32> -> vector<128x256xf32>
    %c0_5 = arith.constant 0 : index
    %c0_6 = arith.constant 0 : index
    %c0_7 = arith.constant 0 : index
    %5 = vector.load %arg5[%c0_5, %c0_6, %c0_7] : memref<1x1x256xf32, #tpu.memory_space<vmem>>, vector<1x1x256xf32>
    %6 = vector.shape_cast %5 : vector<1x1x256xf32> to vector<1x256xf32>
    %7 = vector.broadcast %6 : vector<1x256xf32> to vector<128x256xf32>
    %8 = arith.addf %4, %7 : vector<128x256xf32>
    %cst_8 = arith.constant 0.000000e+00 : f32
    %9 = vector.broadcast %cst_8 : f32 to vector<128x256xf32>
    %10 = arith.maximumf %8, %9 : vector<128x256xf32>
    %c0_9 = arith.constant 0 : index
    %c0_10 = arith.constant 0 : index
    %c0_11 = arith.constant 0 : index
    %11 = vector.load %arg6[%c0_9, %c0_10, %c0_11] : memref<1x128x256xf32, #tpu.memory_space<vmem>>, vector<1x128x256xf32>
    %12 = vector.shape_cast %11 : vector<1x128x256xf32> to vector<128x256xf32>
    %13 = vector.shape_cast %10 : vector<128x256xf32> to vector<1x128x256xf32>
    tpu.vector_store %arg6[%c0_9, %c0_10, %c0_11], %13 {strides = array<i32>} : memref<1x128x256xf32, #tpu.memory_space<vmem>>, vector<1x128x256xf32>,
    return
  }
  func.func @transform_0(%arg0: i32, %arg1: i32, %arg2: i32) -> (i32, i32, i32) {
    %c0_i32 = arith.constant 0 : i32
    %c0_i32_0 = arith.constant 0 : i32
    return %arg0, %arg1, %c0_i32 : i32, i32, i32
  }
  func.func @transform_1(%arg0: i32, %arg1: i32, %arg2: i32) -> (i32, i32, i32) {
    %c0_i32 = arith.constant 0 : i32
    %c0_i32_0 = arith.constant 0 : i32
    return %arg0, %c0_i32, %arg2 : i32, i32, i32
  }
  func.func @transform_2(%arg0: i32, %arg1: i32, %arg2: i32) -> (i32, i32, i32) {
    %c0_i32 = arith.constant 0 : i32
    %c0_i32_0 = arith.constant 0 : i32
    return %arg0, %c0_i32, %arg2 : i32, i32, i32
  }
  func.func @transform_3(%arg0: i32, %arg1: i32, %arg2: i32) -> (i32, i32, i32) {
    %c0_i32 = arith.constant 0 : i32
    return %arg0, %arg1, %arg2 : i32, i32, i32
  }
}

</mosaic_0001>

<llo_original>
// kernel: tpu_custom_call.1
$region0: #{tpu_custom_call.1}
  #allocation0 [shape = 'u32[]', space=smem, size = 0x4, offset = 0x4, fixed_abs, tag = 'smem constant byte address 0x4 - core index']
  #allocation1 [shape = 'u32[72,128]{1,0:T(1,128)}', space=vmem, size = 0x9000, scoped, tag = 'internal scratch']
  %s0 = inlined_call_operand.hbm [shape: bf16[2,128,256], index: 0, kind: input, shape index: {}]
  %s1 = inlined_call_operand.hbm [shape: bf16[2,256,256], index: 1, kind: input, shape index: {}]
  %s2 = inlined_call_operand.hbm [shape: f32[2,1,256], index: 2, kind: input, shape index: {}]
  %s3 = inlined_call_operand.hbm [shape: f32[2,128,256], index: 3, kind: output, shape index: {}]
  %s4 = sld [smem:[#allocation0]]
  $region57: #{tpu_custom_call.1} parent=0
    _
  %s6 = ssub.s32 1, %s4
  %s7 = scalar_select 0, %s6, %s4
  $region1: #{tpu_custom_call.1} parent=0
    #allocation2 [shape = 'u8[131072]{0}', space=vmem, size = 0x20000, scoped, tag = 'input window, operand 0']
    #allocation3 [shape = 's32[2]{0}', space=sflag, size = 0x8, scoped, tag = 'scoped memory for tpu_custom_call.1']
    #allocation4 [shape = 's32[2]{0}', space=sflag, size = 0x8, scoped, tag = 'scoped memory for tpu_custom_call.1']
    #allocation5 [shape = 'u8[262144]{0}', space=vmem, size = 0x40000, scoped, tag = 'input window, operand 1']
    #allocation6 [shape = 's32[2]{0}', space=sflag, size = 0x8, scoped, tag = 'scoped memory for tpu_custom_call.1']
    #allocation7 [shape = 'u8[2048]{0}', space=vmem, size = 0x800, scoped, tag = 'input window, operand 2']
    #allocation8 [shape = 'u8[262144]{0}', space=vmem, size = 0x40000, scoped, tag = 'output window, operand 0']
    %8 = vsyncpa [#allocation3], 0
    %s9 = scalar_lea.sflag [#allocation3], 1
    %10 = vsyncpa %s9, 0
    %11 = vsyncpa [#allocation6], 0
    %s12 = scalar_lea.sflag [#allocation6], 1
    %13 = vsyncpa %s12, 0
    %14 = vsyncpa [#allocation4], 0
    %s15 = scalar_lea.sflag [#allocation4], 1
    %16 = vsyncpa %s15, 0
    loop: start=0, step=1, limit=4
    $region2: #{tpu_custom_call.1} parent=1 // loop_pre_header
      _
    $region3: #{tpu_custom_call.1} parent=1 // loop_header
      %s18 = sphi 0, %s22
      %p19 = scmp.ge.s32.totalorder %s18, 4
      %s25 = sphi 0, %s44
      %s26 = sphi 0, %s40
      %s27 = sphi 0, %s36
      %s28 = sphi 0, %s25
      %s29 = sphi 0, %s26
      %s30 = sphi 0, %s27
      %s31 = sphi 0, %s28
      %s32 = sphi 0, %s29
      %s33 = sphi 0, %s30
      %s49 = sphi 0, %s51
      %s52 = sphi 0, %s49
      %s53 = sphi 0, %s52
      %s69 = sphi 0, %s53
      %s77 = sphi 0, %s79
      %s80 = sphi 0, %s77
      %s81 = sphi 0, %s80
      %s97 = sphi 0, %s81
      %s105 = sphi 0, %s107
      %s108 = sphi 0, %s105
      %s109 = sphi 0, %s108
      %s125 = sphi 0, %s109
      %s135 = sphi 0, %s137
      %s138 = sphi 0, %s135
      %s139 = sphi 0, %s138
      %s155 = sphi 0, %s139
    $region4: #{tpu_custom_call.1} parent=1 // loop_header_branch
      %21 = sbr.rel (%p19) target = $region8
    $region5: #{tpu_custom_call.1} parent=1 // loop_body
      %s23 = ssub.s32 %s18, 1
      %s24 = ssub.s32 %s18, 2
      %s34 = sadd.s32 1, %s27
      %p35 = scmp.ge.s32.totalorder %s34, 1
      %s36 = scalar_select %p35, 0, %s34
      %s37 = sadd.s32 1, %s26
      %s38 = scalar_select %p35, %s37, %s26
      %p39 = scmp.ge.s32.totalorder %s38, 1
      %s40 = scalar_select %p39, 0, %s38
      %s41 = sadd.s32 1, %s25
      %s42 = scalar_select %p39, %s41, %s25
      %p43 = scmp.ge.s32.totalorder %s42, 2
      %s44 = scalar_select %p43, 0, %s42
      %s45 = ssub.s32 %s25, %s44
      %s46 = ssub.s32 %s26, %s40
      %s47 = sor.u32 %s45, %s46
      %p48 = scmp.eq.s32.totalorder %s47, 0
      %s50 = sadd.s32 %s49, 1
      %s51 = scalar_select %p48, %s49, %s50
      %p54 = pneg %p48
      %p55 = scmp.eq.s32.totalorder %s18, 1
      %p56 = por %p54, %p55
      %p57 = scmp.ne.s32.totalorder %s49, %s52
      %p58 = scmp.eq.s32.totalorder %s18, 0
      %p59 = por %p57, %p58
      %p60 = scmp.ne.s32.totalorder %s49, %s52
      %p61 = scmp.eq.s32.totalorder %s23, 1
      %p62 = por %p60, %p61
      %p63 = scmp.ne.s32.totalorder %s52, %s53
      %p64 = scmp.eq.s32.totalorder %s23, 0
      %p65 = por %p63, %p64
      %p66 = scmp.ne.s32.totalorder %s52, %s53
      %p67 = scmp.eq.s32.totalorder %s24, 1
      %p68 = por %p66, %p67
      %p70 = scmp.ne.s32.totalorder %s53, %s69
      %p71 = scmp.eq.s32.totalorder %s24, 0
      %p72 = por %p70, %p71
      %s73 = ssub.s32 %s25, %s44
      %s74 = ssub.s32 %s27, %s36
      %s75 = sor.u32 %s73, %s74
      %p76 = scmp.eq.s32.totalorder %s75, 0
      %s78 = sadd.s32 %s77, 1
      %s79 = scalar_select %p76, %s77, %s78
      %p82 = pneg %p76
      %p83 = scmp.eq.s32.totalorder %s18, 1
      %p84 = por %p82, %p83
      %p85 = scmp.ne.s32.totalorder %s77, %s80
      %p86 = scmp.eq.s32.totalorder %s18, 0
      %p87 = por %p85, %p86
      %p88 = scmp.ne.s32.totalorder %s77, %s80
      %p89 = scmp.eq.s32.totalorder %s23, 1
      %p90 = por %p88, %p89
      %p91 = scmp.ne.s32.totalorder %s80, %s81
      %p92 = scmp.eq.s32.totalorder %s23, 0
      %p93 = por %p91, %p92
      %p94 = scmp.ne.s32.totalorder %s80, %s81
      %p95 = scmp.eq.s32.totalorder %s24, 1
      %p96 = por %p94, %p95
      %p98 = scmp.ne.s32.totalorder %s81, %s97
      %p99 = scmp.eq.s32.totalorder %s24, 0
      %p100 = por %p98, %p99
      %s101 = ssub.s32 %s25, %s44
      %s102 = ssub.s32 %s27, %s36
      %s103 = sor.u32 %s101, %s102
      %p104 = scmp.eq.s32.totalorder %s103, 0
      %s106 = sadd.s32 %s105, 1
      %s107 = scalar_select %p104, %s105, %s106
      %p110 = pneg %p104
      %p111 = scmp.eq.s32.totalorder %s18, 1
      %p112 = por %p110, %p111
      %p113 = scmp.ne.s32.totalorder %s105, %s108
      %p114 = scmp.eq.s32.totalorder %s18, 0
      %p115 = por %p113, %p114
      %p116 = scmp.ne.s32.totalorder %s105, %s108
      %p117 = scmp.eq.s32.totalorder %s23, 1
      %p118 = por %p116, %p117
      %p119 = scmp.ne.s32.totalorder %s108, %s109
      %p120 = scmp.eq.s32.totalorder %s23, 0
      %p121 = por %p119, %p120
      %p122 = scmp.ne.s32.totalorder %s108, %s109
      %p123 = scmp.eq.s32.totalorder %s24, 1
      %p124 = por %p122, %p123
      %p126 = scmp.ne.s32.totalorder %s109, %s125
      %p127 = scmp.eq.s32.totalorder %s24, 0
      %p128 = por %p126, %p127
      %s129 = ssub.s32 %s25, %s44
      %s130 = ssub.s32 %s26, %s40
      %s131 = sor.u32 %s129, %s130
      %s132 = ssub.s32 %s27, %s36
      %s133 = sor.u32 %s131, %s132
      %p134 = scmp.eq.s32.totalorder %s133, 0
      %s136 = sadd.s32 %s135, 1
      %s137 = scalar_select %p134, %s135, %s136
      %p140 = pneg %p134
      %p141 = scmp.eq.s32.totalorder %s18, 1
      %p142 = por %p140, %p141
      %p143 = scmp.ne.s32.totalorder %s135, %s138
      %p144 = scmp.eq.s32.totalorder %s18, 0
      %p145 = por %p143, %p144
      %p146 = scmp.ne.s32.totalorder %s135, %s138
      %p147 = scmp.eq.s32.totalorder %s23, 1
      %p148 = por %p146, %p147
      %p149 = scmp.ne.s32.totalorder %s138, %s139
      %p150 = scmp.eq.s32.totalorder %s23, 0
      %p151 = por %p149, %p150
      %p152 = scmp.ne.s32.totalorder %s138, %s139
      %p153 = scmp.eq.s32.totalorder %s24, 1
      %p154 = por %p152, %p153
      %p156 = scmp.ne.s32.totalorder %s139, %s155
      %p157 = scmp.eq.s32.totalorder %s24, 0
      %p158 = por %p156, %p157
      %p159 = scmp.le.s32.totalorder 1, %s18
      %p160 = scmp.lt.s32.totalorder %s18, 3
      %p161 = pnand %p159, %p160
      %p162 = pneg %p161
      // Predicated region
      $region9: #{tpu_custom_call.1} parent=5 // pred_check
        _
      $region10: #{tpu_custom_call.1} parent=5 // pred_check_branch
        %164 = sbr.rel (%p161) target = $region12
      $region11: #{tpu_custom_call.1} parent=5 // pred_region
        %s165 = ssub.s32 %s18, 1
      $region12: #{tpu_custom_call.1} parent=5 // pred_fallthru
        _
      %p166 = scmp.lt.s32.totalorder %s18, 2
      // Predicated region
      $region13: #{tpu_custom_call.1} parent=5 // pred_check
        %p167 = pneg %p166
      $region14: #{tpu_custom_call.1} parent=5 // pred_check_branch
        %169 = sbr.rel (%p167) target = $region16
      $region15: #{tpu_custom_call.1} parent=5 // pred_region
        // Predicated region
        $region17: #{tpu_custom_call.1} parent=15 // pred_check
          %p170 = pneg %p59
        $region18: #{tpu_custom_call.1} parent=15 // pred_check_branch
          %172 = sbr.rel (%p170) target = $region20
        $region19: #{tpu_custom_call.1} parent=15 // pred_region
          %s173 = sand.u32 %s49, 1
          %s174 = scalar_lea.sflag [#allocation3], %s173
          %s175 = sand.u32 %s49, 1
          %s176 = smul.addr %s175, 128
          %s177 = scalar_lea.vmem [#allocation2], %s176
          %s178 = smul.u32 16, %s26
          %180 = vsyncadd %s174, 0
          %s181 = smul.addr %s178, 2
          %s182 = smul.addr %s25, 32
          %s183 = sadd.s32 %s181, %s182
          %s184 = smul.addr %s183, 4
          %s185 = scalar_lea.hbm %s0, %s184
          %s186 = sshll.u32 %s185, 4
          %s187 = int_to_ptr.hbm [resolvable:$true] %s186
          %s188 = sshll.u32 %s177, 4
          %s189 = int_to_ptr.vmem [resolvable:$true] %s188
          %194 = dma.hbm_to_vmem [thread:$0]  %s187, 2048, %s189, %s174, 128, 128, 8
        $region20: #{tpu_custom_call.1} parent=15 // pred_fallthru
          _
        // Predicated region
        $region21: #{tpu_custom_call.1} parent=15 // pred_check
          %p195 = pneg %p87
        $region22: #{tpu_custom_call.1} parent=15 // pred_check_branch
          %197 = sbr.rel (%p195) target = $region24
        $region23: #{tpu_custom_call.1} parent=15 // pred_region
          %s198 = sand.u32 %s18, 1
          %s199 = scalar_lea.sflag [#allocation6], %s198
          %s200 = sand.u32 %s77, 1
          %s201 = smul.addr %s200, 256
          %s202 = scalar_lea.vmem [#allocation5], %s201
          %s203 = smul.u32 2, %s27
          %205 = vsyncadd %s199, 0
          %s206 = smul.addr %s25, 64
          %s207 = sadd.s32 %s203, %s206
          %s208 = smul.addr %s207, 4
          %s209 = scalar_lea.hbm %s1, %s208
          %s210 = sshll.u32 %s209, 4
          %s211 = int_to_ptr.hbm [resolvable:$true] %s210
          %s212 = sshll.u32 %s202, 4
          %s213 = int_to_ptr.vmem [resolvable:$true] %s212
          %218 = dma.hbm_to_vmem [thread:$0]  %s211, 4096, %s213, %s199, 128, 128, 8
        $region24: #{tpu_custom_call.1} parent=15 // pred_fallthru
          _
        // Predicated region
        $region25: #{tpu_custom_call.1} parent=15 // pred_check
          %p219 = pneg %p115
        $region26: #{tpu_custom_call.1} parent=15 // pred_check_branch
          %221 = sbr.rel (%p219) target = $region28
        $region27: #{tpu_custom_call.1} parent=15 // pred_region
          %s222 = sand.u32 %s18, 1
          %s223 = scalar_lea.sflag [#allocation6], %s222
          %s224 = sand.u32 %s105, 1
          %s225 = smul.addr %s224, 2
          %s226 = scalar_lea.vmem [#allocation7], %s225
          %s227 = smul.u32 2, %s27
          %229 = vsyncadd %s223, 0
          %s230 = smul.addr %s25, 2
          %s231 = sadd.s32 %s227, %s230
          %s232 = scalar_lea.hbm %s2, %s231
          %s234 = sshll.u32 %s232, 4
          %s235 = int_to_ptr.hbm [resolvable:$true] %s234
          %s236 = sshll.u32 %s226, 4
          %s237 = int_to_ptr.vmem [resolvable:$true] %s236
          %239 = dma.hbm_to_vmem [thread:$0]  %s235, 32, %s237, %s223
        $region28: #{tpu_custom_call.1} parent=15 // pred_fallthru
          _
      $region16: #{tpu_custom_call.1} parent=5 // pred_fallthru
        _
      %p240 = scmp.le.s32.totalorder 1, %s18
      %p241 = scmp.lt.s32.totalorder %s18, 3
      %p242 = pnand %p240, %p241
      %p243 = pneg %p242
      // Predicated region
      $region29: #{tpu_custom_call.1} parent=5 // pred_check
        _
      $region30: #{tpu_custom_call.1} parent=5 // pred_check_branch
        %245 = sbr.rel (%p242) target = $region32
      $region31: #{tpu_custom_call.1} parent=5 // pred_region
        %s246 = ssub.s32 %s18, 1
        %s247 = sand.u32 %s52, 1
        %s248 = scalar_lea.sflag [#allocation3], %s247
        %s249 = sand.u32 %s52, 1
        %s250 = smul.addr %s249, 128
        %s251 = scalar_lea.vmem [#allocation2], %s250
        // Predicated region
        $region33: #{tpu_custom_call.1} parent=31 // pred_check
          %p252 = pneg %p65
        $region34: #{tpu_custom_call.1} parent=31 // pred_check_branch
          %254 = sbr.rel (%p252) target = $region36
        $region35: #{tpu_custom_call.1} parent=31 // pred_region
          %256 = dma.done %s248, 2048
        $region36: #{tpu_custom_call.1} parent=31 // pred_fallthru
          _
        %s257 = sand.u32 %s23, 1
        %s258 = scalar_lea.sflag [#allocation6], %s257
        %s259 = sand.u32 %s80, 1
        %s260 = smul.addr %s259, 256
        %s261 = scalar_lea.vmem [#allocation5], %s260
        // Predicated region
        $region37: #{tpu_custom_call.1} parent=31 // pred_check
          %p262 = pneg %p93
        $region38: #{tpu_custom_call.1} parent=31 // pred_check_branch
          %264 = sbr.rel (%p262) target = $region40
        $region39: #{tpu_custom_call.1} parent=31 // pred_region
          %266 = dma.done %s258, 4096
        $region40: #{tpu_custom_call.1} parent=31 // pred_fallthru
          _
        %s267 = sand.u32 %s23, 1
        %s268 = scalar_lea.sflag [#allocation6], %s267
        %s269 = sand.u32 %s108, 1
        %s270 = smul.addr %s269, 2
        %s271 = scalar_lea.vmem [#allocation7], %s270
        // Predicated region
        $region41: #{tpu_custom_call.1} parent=31 // pred_check
          %p272 = pneg %p121
        $region42: #{tpu_custom_call.1} parent=31 // pred_check_branch
          %274 = sbr.rel (%p272) target = $region44
        $region43: #{tpu_custom_call.1} parent=31 // pred_region
          %276 = dma.done %s268, 32
        $region44: #{tpu_custom_call.1} parent=31 // pred_fallthru
          _
        %s277 = sand.u32 %s52, 1
        %s278 = scalar_lea.sflag [#allocation3], %s277
        %s279 = sand.u32 %s52, 1
        %s280 = smul.addr %s279, 128
        %s281 = scalar_lea.vmem [#allocation2], %s280
        %p282 = pneg %p65
        %p283 = pneg %p62
        %s284 = sand.u32 %s23, 1
        %s285 = scalar_lea.sflag [#allocation6], %s284
        %s286 = sand.u32 %s80, 1
        %s287 = smul.addr %s286, 256
        %s288 = scalar_lea.vmem [#allocation5], %s287
        %p289 = pneg %p93
        %p290 = pneg %p90
        %s291 = sand.u32 %s23, 1
        %s292 = scalar_lea.sflag [#allocation6], %s291
        %s293 = sand.u32 %s108, 1
        %s294 = smul.addr %s293, 2
        %s295 = scalar_lea.vmem [#allocation7], %s294
        %p296 = pneg %p121
        %p297 = pneg %p118
        %p298 = pneg %p151
        %p299 = pneg %p148
        %s300 = sand.u32 %s138, 1
        %s301 = scalar_lea.sflag [#allocation4], %s300
        %s302 = sand.u32 %s138, 1
        %s303 = smul.addr %s302, 256
        %s304 = scalar_lea.vmem [#allocation8], %s303
        %s305 = smul.u32 16, %s29
        %s306 = smul.u32 2, %s30
        %s307 = smul.u32 2, %s30
        %s308 = smul.u32 16, %s29
        %s309 = smul.u32 2, %s30
        %v310 = vld [vmem:[%s251] sm:$0xff]
        %v311 = vld [vmem:[%s251 + $0x8] sm:$0xff]
        %v312 = vld [vmem:[%s251 + $0x10] sm:$0xff]
        %v313 = vld [vmem:[%s251 + $0x18] sm:$0xff]
        %v314 = vld [vmem:[%s251 + $0x20] sm:$0xff]
        %v315 = vld [vmem:[%s251 + $0x28] sm:$0xff]
        %v316 = vld [vmem:[%s251 + $0x30] sm:$0xff]
        %v317 = vld [vmem:[%s251 + $0x38] sm:$0xff]
        %v318 = vld [vmem:[%s251 + $0x40] sm:$0xff]
        %v319 = vld [vmem:[%s251 + $0x48] sm:$0xff]
        %v320 = vld [vmem:[%s251 + $0x50] sm:$0xff]
        %v321 = vld [vmem:[%s251 + $0x58] sm:$0xff]
        %v322 = vld [vmem:[%s251 + $0x60] sm:$0xff]
        %v323 = vld [vmem:[%s251 + $0x68] sm:$0xff]
        %v324 = vld [vmem:[%s251 + $0x70] sm:$0xff]
        %v325 = vld [vmem:[%s251 + $0x78] sm:$0xff]
        %v326 = vld [vmem:[%s261] sm:$0xff]
        %v327 = vld [vmem:[%s261 + $0x8] sm:$0xff]
        %v328 = vld [vmem:[%s261 + $0x10] sm:$0xff]
        %v329 = vld [vmem:[%s261 + $0x18] sm:$0xff]
        %v330 = vld [vmem:[%s261 + $0x20] sm:$0xff]
        %v331 = vld [vmem:[%s261 + $0x28] sm:$0xff]
        %v332 = vld [vmem:[%s261 + $0x30] sm:$0xff]
        %v333 = vld [vmem:[%s261 + $0x38] sm:$0xff]
        %v334 = vld [vmem:[%s261 + $0x40] sm:$0xff]
        %v335 = vld [vmem:[%s261 + $0x48] sm:$0xff]
        %v336 = vld [vmem:[%s261 + $0x50] sm:$0xff]
        %v337 = vld [vmem:[%s261 + $0x58] sm:$0xff]
        %v338 = vld [vmem:[%s261 + $0x60] sm:$0xff]
        %v339 = vld [vmem:[%s261 + $0x68] sm:$0xff]
        %v340 = vld [vmem:[%s261 + $0x70] sm:$0xff]
        %v341 = vld [vmem:[%s261 + $0x78] sm:$0xff]
        %v342 = vld [vmem:[%s261 + $0x80] sm:$0xff]
        %v343 = vld [vmem:[%s261 + $0x88] sm:$0xff]
        %v344 = vld [vmem:[%s261 + $0x90] sm:$0xff]
        %v345 = vld [vmem:[%s261 + $0x98] sm:$0xff]
        %v346 = vld [vmem:[%s261 + $0xa0] sm:$0xff]
        %v347 = vld [vmem:[%s261 + $0xa8] sm:$0xff]
        %v348 = vld [vmem:[%s261 + $0xb0] sm:$0xff]
        %v349 = vld [vmem:[%s261 + $0xb8] sm:$0xff]
        %v350 = vld [vmem:[%s261 + $0xc0] sm:$0xff]
        %v351 = vld [vmem:[%s261 + $0xc8] sm:$0xff]
        %v352 = vld [vmem:[%s261 + $0xd0] sm:$0xff]
        %v353 = vld [vmem:[%s261 + $0xd8] sm:$0xff]
        %v354 = vld [vmem:[%s261 + $0xe0] sm:$0xff]
        %v355 = vld [vmem:[%s261 + $0xe8] sm:$0xff]
        %v356 = vld [vmem:[%s261 + $0xf0] sm:$0xff]
        %v357 = vld [vmem:[%s261 + $0xf8] sm:$0xff]
        %v358 = vld [vmem:[%s271] sm:$0x3]
        %v360 = vperm.slane %v358, 0
        %v361 = vperm.slane %v358, 1
        %v380 = vunpack.c.l.b16 %v310
        %v381 = vunpack.c.h.b16 %v310
        %v382 = vunpack.c.l.b16 %v311
        %v383 = vunpack.c.h.b16 %v311
        %v384 = vunpack.c.l.b16 %v312
        %v385 = vunpack.c.h.b16 %v312
        %v386 = vunpack.c.l.b16 %v313
        %v387 = vunpack.c.h.b16 %v313
        %v388 = vunpack.c.l.b16 %v314
        %v389 = vunpack.c.h.b16 %v314
        %v390 = vunpack.c.l.b16 %v315
        %v391 = vunpack.c.h.b16 %v315
        %v392 = vunpack.c.l.b16 %v316
        %v393 = vunpack.c.h.b16 %v316
        %v394 = vunpack.c.l.b16 %v317
        %v395 = vunpack.c.h.b16 %v317
        %v396 = vunpack.c.l.b16 %v318
        %v397 = vunpack.c.h.b16 %v318
        %v398 = vunpack.c.l.b16 %v319
        %v399 = vunpack.c.h.b16 %v319
        %v400 = vunpack.c.l.b16 %v320
        %v401 = vunpack.c.h.b16 %v320
        %v402 = vunpack.c.l.b16 %v321
        %v403 = vunpack.c.h.b16 %v321
        %v404 = vunpack.c.l.b16 %v322
        %v405 = vunpack.c.h.b16 %v322
        %v406 = vunpack.c.l.b16 %v323
        %v407 = vunpack.c.h.b16 %v323
        %v408 = vunpack.c.l.b16 %v324
        %v409 = vunpack.c.h.b16 %v324
        %v410 = vunpack.c.l.b16 %v325
        %v411 = vunpack.c.h.b16 %v325
        %v412 = vpack.c.b16 %v382, %v380
        %v413 = vpack.c.b16 %v383, %v381
        %v414 = vpack.c.b16 %v386, %v384
        %v415 = vpack.c.b16 %v387, %v385
        %v416 = vpack.c.b16 %v390, %v388
        %v417 = vpack.c.b16 %v391, %v389
        %v418 = vpack.c.b16 %v394, %v392
        %v419 = vpack.c.b16 %v395, %v393
        %v420 = vpack.c.b16 %v398, %v396
        %v421 = vpack.c.b16 %v399, %v397
        %v422 = vpack.c.b16 %v402, %v400
        %v423 = vpack.c.b16 %v403, %v401
        %v424 = vpack.c.b16 %v406, %v404
        %v425 = vpack.c.b16 %v407, %v405
        %v426 = vpack.c.b16 %v410, %v408
        %v427 = vpack.c.b16 %v411, %v409
        %v476 = vunpack.c.l.b16 %v326
        %v477 = vunpack.c.h.b16 %v326
        %v478 = vunpack.c.l.b16 %v327
        %v479 = vunpack.c.h.b16 %v327
        %v480 = vunpack.c.l.b16 %v328
        %v481 = vunpack.c.h.b16 %v328
        %v482 = vunpack.c.l.b16 %v329
        %v483 = vunpack.c.h.b16 %v329
        %v484 = vunpack.c.l.b16 %v330
        %v485 = vunpack.c.h.b16 %v330
        %v486 = vunpack.c.l.b16 %v331
        %v487 = vunpack.c.h.b16 %v331
        %v488 = vunpack.c.l.b16 %v332
        %v489 = vunpack.c.h.b16 %v332
        %v490 = vunpack.c.l.b16 %v333
        %v491 = vunpack.c.h.b16 %v333
        %v492 = vunpack.c.l.b16 %v334
        %v493 = vunpack.c.h.b16 %v334
        %v494 = vunpack.c.l.b16 %v335
        %v495 = vunpack.c.h.b16 %v335
        %v496 = vunpack.c.l.b16 %v336
        %v497 = vunpack.c.h.b16 %v336
        %v498 = vunpack.c.l.b16 %v337
        %v499 = vunpack.c.h.b16 %v337
        %v500 = vunpack.c.l.b16 %v338
        %v501 = vunpack.c.h.b16 %v338
        %v502 = vunpack.c.l.b16 %v339
        %v503 = vunpack.c.h.b16 %v339
        %v504 = vunpack.c.l.b16 %v340
        %v505 = vunpack.c.h.b16 %v340
        %v506 = vunpack.c.l.b16 %v341
        %v507 = vunpack.c.h.b16 %v341
        %v508 = vunpack.c.l.b16 %v342
        %v509 = vunpack.c.h.b16 %v342
        %v510 = vunpack.c.l.b16 %v343
        %v511 = vunpack.c.h.b16 %v343
        %v512 = vunpack.c.l.b16 %v344
        %v513 = vunpack.c.h.b16 %v344
        %v514 = vunpack.c.l.b16 %v345
        %v515 = vunpack.c.h.b16 %v345
        %v516 = vunpack.c.l.b16 %v346
        %v517 = vunpack.c.h.b16 %v346
        %v518 = vunpack.c.l.b16 %v347
        %v519 = vunpack.c.h.b16 %v347
        %v520 = vunpack.c.l.b16 %v348
        %v521 = vunpack.c.h.b16 %v348
        %v522 = vunpack.c.l.b16 %v349
        %v523 = vunpack.c.h.b16 %v349
        %v524 = vunpack.c.l.b16 %v350
        %v525 = vunpack.c.h.b16 %v350
        %v526 = vunpack.c.l.b16 %v351
        %v527 = vunpack.c.h.b16 %v351
        %v528 = vunpack.c.l.b16 %v352
        %v529 = vunpack.c.h.b16 %v352
        %v530 = vunpack.c.l.b16 %v353
        %v531 = vunpack.c.h.b16 %v353
        %v532 = vunpack.c.l.b16 %v354
        %v533 = vunpack.c.h.b16 %v354
        %v534 = vunpack.c.l.b16 %v355
        %v535 = vunpack.c.h.b16 %v355
        %v536 = vunpack.c.l.b16 %v356
        %v537 = vunpack.c.h.b16 %v356
        %v538 = vunpack.c.l.b16 %v357
        %v539 = vunpack.c.h.b16 %v357
        %v540 = vpack.c.b16 %v478, %v476
        %v541 = vpack.c.b16 %v479, %v477
        %v542 = vpack.c.b16 %v482, %v480
        %v543 = vpack.c.b16 %v483, %v481
        %v544 = vpack.c.b16 %v486, %v484
        %v545 = vpack.c.b16 %v487, %v485
        %v546 = vpack.c.b16 %v490, %v488
        %v547 = vpack.c.b16 %v491, %v489
        %v548 = vpack.c.b16 %v494, %v492
        %v549 = vpack.c.b16 %v495, %v493
        %v550 = vpack.c.b16 %v498, %v496
        %v551 = vpack.c.b16 %v499, %v497
        %v552 = vpack.c.b16 %v502, %v500
        %v553 = vpack.c.b16 %v503, %v501
        %v554 = vpack.c.b16 %v506, %v504
        %v555 = vpack.c.b16 %v507, %v505
        %v556 = vpack.c.b16 %v510, %v508
        %v557 = vpack.c.b16 %v511, %v509
        %v558 = vpack.c.b16 %v514, %v512
        %v559 = vpack.c.b16 %v515, %v513
        %v560 = vpack.c.b16 %v518, %v516
        %v561 = vpack.c.b16 %v519, %v517
        %v562 = vpack.c.b16 %v522, %v520
        %v563 = vpack.c.b16 %v523, %v521
        %v564 = vpack.c.b16 %v526, %v524
        %v565 = vpack.c.b16 %v527, %v525
        %v566 = vpack.c.b16 %v530, %v528
        %v567 = vpack.c.b16 %v531, %v529
        %v568 = vpack.c.b16 %v534, %v532
        %v569 = vpack.c.b16 %v535, %v533
        %v570 = vpack.c.b16 %v538, %v536
        %v571 = vpack.c.b16 %v539, %v537
        %604 = vmatpush.bf16.msra.mxu0 %v554
        %605 = vmatpush.bf16.msra.mxu0 %v552
        %606 = vmatpush.bf16.msra.mxu0 %v550
        %607 = vmatpush.bf16.msra.mxu0 %v548
        %608 = vmatpush.bf16.msra.mxu0 %v546
        %609 = vmatpush.bf16.msra.mxu0 %v544
        %610 = vmatpush.bf16.msra.mxu0 %v542
        %611 = vmatpush.bf16.msra.mxu0 %v540
        %612 = vmatmul.bf16.gmra.mxu0 %v412
        %v613 = vpop.f32.mrf.mxu0
        %v614 = vadd.f32 %v360, %v613
        %v615 = vpop.f32.mrf.mxu0
        %v616 = vadd.f32 %v360, %v615
        %617 = vmatmul.bf16.gmra.mxu0 %v414
        %v618 = vpop.f32.mrf.mxu0
        %v619 = vadd.f32 %v360, %v618
        %v620 = vpop.f32.mrf.mxu0
        %v621 = vadd.f32 %v360, %v620
        %622 = vmatmul.bf16.gmra.mxu0 %v416
        %v623 = vpop.f32.mrf.mxu0
        %v624 = vadd.f32 %v360, %v623
        %v625 = vpop.f32.mrf.mxu0
        %v626 = vadd.f32 %v360, %v625
        %627 = vmatmul.bf16.gmra.mxu0 %v418
        %v628 = vpop.f32.mrf.mxu0
        %v629 = vadd.f32 %v360, %v628
        %v630 = vpop.f32.mrf.mxu0
        %v631 = vadd.f32 %v360, %v630
        %632 = vmatmul.bf16.gmra.mxu0 %v420
        %v633 = vpop.f32.mrf.mxu0
        %v634 = vadd.f32 %v360, %v633
        %v635 = vpop.f32.mrf.mxu0
        %v636 = vadd.f32 %v360, %v635
        %637 = vmatmul.bf16.gmra.mxu0 %v422
        %v638 = vpop.f32.mrf.mxu0
        %v639 = vadd.f32 %v360, %v638
        %v640 = vpop.f32.mrf.mxu0
        %v641 = vadd.f32 %v360, %v640
        %642 = vmatmul.bf16.gmra.mxu0 %v424
        %v643 = vpop.f32.mrf.mxu0
        %v644 = vadd.f32 %v360, %v643
        %v645 = vpop.f32.mrf.mxu0
        %v646 = vadd.f32 %v360, %v645
        %647 = vmatmul.bf16.gmra.mxu0 %v426
        %v648 = vpop.f32.mrf.mxu0
        %v649 = vadd.f32 %v360, %v648
        %v650 = vpop.f32.mrf.mxu0
        %v651 = vadd.f32 %v360, %v650
        %652 = vdwg.mxu0
        %653 = vmatpush.bf16.msra.mxu0 %v570
        %654 = vmatpush.bf16.msra.mxu0 %v568
        %655 = vmatpush.bf16.msra.mxu0 %v566
        %656 = vmatpush.bf16.msra.mxu0 %v564
        %657 = vmatpush.bf16.msra.mxu0 %v562
        %658 = vmatpush.bf16.msra.mxu0 %v560
        %659 = vmatpush.bf16.msra.mxu0 %v558
        %660 = vmatpush.bf16.msra.mxu0 %v556
        %661 = vmatmul.bf16.gmra.mxu0 %v413
        %v662 = vpop.f32.mrf.mxu0
        %v663 = vadd.f32 %v614, %v662
        %v664 = vpop.f32.mrf.mxu0
        %v665 = vadd.f32 %v616, %v664
        %666 = vmatmul.bf16.gmra.mxu0 %v415
        %v667 = vpop.f32.mrf.mxu0
        %v668 = vadd.f32 %v619, %v667
        %v669 = vpop.f32.mrf.mxu0
        %v670 = vadd.f32 %v621, %v669
        %671 = vmatmul.bf16.gmra.mxu0 %v417
        %v672 = vpop.f32.mrf.mxu0
        %v673 = vadd.f32 %v624, %v672
        %v674 = vpop.f32.mrf.mxu0
        %v675 = vadd.f32 %v626, %v674
        %676 = vmatmul.bf16.gmra.mxu0 %v419
        %v677 = vpop.f32.mrf.mxu0
        %v678 = vadd.f32 %v629, %v677
        %v679 = vpop.f32.mrf.mxu0
        %v680 = vadd.f32 %v631, %v679
        %681 = vmatmul.bf16.gmra.mxu0 %v421
        %v682 = vpop.f32.mrf.mxu0
        %v683 = vadd.f32 %v634, %v682
        %v684 = vpop.f32.mrf.mxu0
        %v685 = vadd.f32 %v636, %v684
        %686 = vmatmul.bf16.gmra.mxu0 %v423
        %v687 = vpop.f32.mrf.mxu0
        %v688 = vadd.f32 %v639, %v687
        %v689 = vpop.f32.mrf.mxu0
        %v690 = vadd.f32 %v641, %v689
        %691 = vmatmul.bf16.gmra.mxu0 %v425
        %v692 = vpop.f32.mrf.mxu0
        %v693 = vadd.f32 %v644, %v692
        %v694 = vpop.f32.mrf.mxu0
        %v695 = vadd.f32 %v646, %v694
        %696 = vmatmul.bf16.gmra.mxu0 %v427
        %v697 = vpop.f32.mrf.mxu0
        %v698 = vadd.f32 %v649, %v697
        %v699 = vpop.f32.mrf.mxu0
        %v700 = vadd.f32 %v651, %v699
        %701 = vdwg.mxu0
        %702 = vmatpush.bf16.msra.mxu0 %v555
        %703 = vmatpush.bf16.msra.mxu0 %v553
        %704 = vmatpush.bf16.msra.mxu0 %v551
        %705 = vmatpush.bf16.msra.mxu0 %v549
        %706 = vmatpush.bf16.msra.mxu0 %v547
        %707 = vmatpush.bf16.msra.mxu0 %v545
        %708 = vmatpush.bf16.msra.mxu0 %v543
        %709 = vmatpush.bf16.msra.mxu0 %v541
        %710 = vmatmul.bf16.gmra.mxu0 %v412
        %v711 = vpop.f32.mrf.mxu0
        %v712 = vadd.f32 %v361, %v711
        %v713 = vpop.f32.mrf.mxu0
        %v714 = vadd.f32 %v361, %v713
        %715 = vmatmul.bf16.gmra.mxu0 %v414
        %v716 = vpop.f32.mrf.mxu0
        %v717 = vadd.f32 %v361, %v716
        %v718 = vpop.f32.mrf.mxu0
        %v719 = vadd.f32 %v361, %v718
        %720 = vmatmul.bf16.gmra.mxu0 %v416
        %v721 = vpop.f32.mrf.mxu0
        %v722 = vadd.f32 %v361, %v721
        %v723 = vpop.f32.mrf.mxu0
        %v724 = vadd.f32 %v361, %v723
        %725 = vmatmul.bf16.gmra.mxu0 %v418
        %v726 = vpop.f32.mrf.mxu0
        %v727 = vadd.f32 %v361, %v726
        %v728 = vpop.f32.mrf.mxu0
        %v729 = vadd.f32 %v361, %v728
        %730 = vmatmul.bf16.gmra.mxu0 %v420
        %v731 = vpop.f32.mrf.mxu0
        %v732 = vadd.f32 %v361, %v731
        %v733 = vpop.f32.mrf.mxu0
        %v734 = vadd.f32 %v361, %v733
        %735 = vmatmul.bf16.gmra.mxu0 %v422
        %v736 = vpop.f32.mrf.mxu0
        %v737 = vadd.f32 %v361, %v736
        %v738 = vpop.f32.mrf.mxu0
        %v739 = vadd.f32 %v361, %v738
        %740 = vmatmul.bf16.gmra.mxu0 %v424
        %v741 = vpop.f32.mrf.mxu0
        %v742 = vadd.f32 %v361, %v741
        %v743 = vpop.f32.mrf.mxu0
        %v744 = vadd.f32 %v361, %v743
        %745 = vmatmul.bf16.gmra.mxu0 %v426
        %v746 = vpop.f32.mrf.mxu0
        %v747 = vadd.f32 %v361, %v746
        %v748 = vpop.f32.mrf.mxu0
        %v749 = vadd.f32 %v361, %v748
        %750 = vdwg.mxu0
        %751 = vmatpush.bf16.msra.mxu0 %v571
        %752 = vmatpush.bf16.msra.mxu0 %v569
        %753 = vmatpush.bf16.msra.mxu0 %v567
        %754 = vmatpush.bf16.msra.mxu0 %v565
        %755 = vmatpush.bf16.msra.mxu0 %v563
        %756 = vmatpush.bf16.msra.mxu0 %v561
        %757 = vmatpush.bf16.msra.mxu0 %v559
        %758 = vmatpush.bf16.msra.mxu0 %v557
        %759 = vmatmul.bf16.gmra.mxu0 %v413
        %v760 = vpop.f32.mrf.mxu0
        %v761 = vadd.f32 %v712, %v760
        %v762 = vpop.f32.mrf.mxu0
        %v763 = vadd.f32 %v714, %v762
        %764 = vmatmul.bf16.gmra.mxu0 %v415
        %v765 = vpop.f32.mrf.mxu0
        %v766 = vadd.f32 %v717, %v765
        %v767 = vpop.f32.mrf.mxu0
        %v768 = vadd.f32 %v719, %v767
        %769 = vmatmul.bf16.gmra.mxu0 %v417
        %v770 = vpop.f32.mrf.mxu0
        %v771 = vadd.f32 %v722, %v770
        %v772 = vpop.f32.mrf.mxu0
        %v773 = vadd.f32 %v724, %v772
        %774 = vmatmul.bf16.gmra.mxu0 %v419
        %v775 = vpop.f32.mrf.mxu0
        %v776 = vadd.f32 %v727, %v775
        %v777 = vpop.f32.mrf.mxu0
        %v778 = vadd.f32 %v729, %v777
        %779 = vmatmul.bf16.gmra.mxu0 %v421
        %v780 = vpop.f32.mrf.mxu0
        %v781 = vadd.f32 %v732, %v780
        %v782 = vpop.f32.mrf.mxu0
        %v783 = vadd.f32 %v734, %v782
        %784 = vmatmul.bf16.gmra.mxu0 %v423
        %v785 = vpop.f32.mrf.mxu0
        %v786 = vadd.f32 %v737, %v785
        %v787 = vpop.f32.mrf.mxu0
        %v788 = vadd.f32 %v739, %v787
        %789 = vmatmul.bf16.gmra.mxu0 %v425
        %v790 = vpop.f32.mrf.mxu0
        %v791 = vadd.f32 %v742, %v790
        %v792 = vpop.f32.mrf.mxu0
        %v793 = vadd.f32 %v744, %v792
        %794 = vmatmul.bf16.gmra.mxu0 %v427
        %v795 = vpop.f32.mrf.mxu0
        %v796 = vadd.f32 %v747, %v795
        %v797 = vpop.f32.mrf.mxu0
        %v798 = vadd.f32 %v749, %v797
        %799 = vdwg.mxu0
        %v800 = vmax.f32 %v663, 0.0
        %v801 = vmax.f32 %v761, 0.0
        %v802 = vmax.f32 %v665, 0.0
        %v803 = vmax.f32 %v763, 0.0
        %v804 = vmax.f32 %v668, 0.0
        %v805 = vmax.f32 %v766, 0.0
        %v806 = vmax.f32 %v670, 0.0
        %v807 = vmax.f32 %v768, 0.0
        %v808 = vmax.f32 %v673, 0.0
        %v809 = vmax.f32 %v771, 0.0
        %v810 = vmax.f32 %v675, 0.0
        %v811 = vmax.f32 %v773, 0.0
        %v812 = vmax.f32 %v678, 0.0
        %v813 = vmax.f32 %v776, 0.0
        %v814 = vmax.f32 %v680, 0.0
        %v815 = vmax.f32 %v778, 0.0
        %v816 = vmax.f32 %v683, 0.0
        %v817 = vmax.f32 %v781, 0.0
        %v818 = vmax.f32 %v685, 0.0
        %v819 = vmax.f32 %v783, 0.0
        %v820 = vmax.f32 %v688, 0.0
        %v821 = vmax.f32 %v786, 0.0
        %v822 = vmax.f32 %v690, 0.0
        %v823 = vmax.f32 %v788, 0.0
        %v824 = vmax.f32 %v693, 0.0
        %v825 = vmax.f32 %v791, 0.0
        %v826 = vmax.f32 %v695, 0.0
        %v827 = vmax.f32 %v793, 0.0
        %v828 = vmax.f32 %v698, 0.0
        %v829 = vmax.f32 %v796, 0.0
        %v830 = vmax.f32 %v700, 0.0
        %v831 = vmax.f32 %v798, 0.0
        %832 = vst [vmem:[%s304] sm:$0xff] %v800
        %833 = vst [vmem:[%s304 + $0x8] sm:$0xff] %v801
        %834 = vst [vmem:[%s304 + $0x10] sm:$0xff] %v802
        %835 = vst [vmem:[%s304 + $0x18] sm:$0xff] %v803
        %836 = vst [vmem:[%s304 + $0x20] sm:$0xff] %v804
        %837 = vst [vmem:[%s304 + $0x28] sm:$0xff] %v805
        %838 = vst [vmem:[%s304 + $0x30] sm:$0xff] %v806
        %839 = vst [vmem:[%s304 + $0x38] sm:$0xff] %v807
        %840 = vst [vmem:[%s304 + $0x40] sm:$0xff] %v808
        %841 = vst [vmem:[%s304 + $0x48] sm:$0xff] %v809
        %842 = vst [vmem:[%s304 + $0x50] sm:$0xff] %v810
        %843 = vst [vmem:[%s304 + $0x58] sm:$0xff] %v811
        %844 = vst [vmem:[%s304 + $0x60] sm:$0xff] %v812
        %845 = vst [vmem:[%s304 + $0x68] sm:$0xff] %v813
        %846 = vst [vmem:[%s304 + $0x70] sm:$0xff] %v814
        %847 = vst [vmem:[%s304 + $0x78] sm:$0xff] %v815
        %848 = vst [vmem:[%s304 + $0x80] sm:$0xff] %v816
        %849 = vst [vmem:[%s304 + $0x88] sm:$0xff] %v817
        %850 = vst [vmem:[%s304 + $0x90] sm:$0xff] %v818
        %851 = vst [vmem:[%s304 + $0x98] sm:$0xff] %v819
        %852 = vst [vmem:[%s304 + $0xa0] sm:$0xff] %v820
        %853 = vst [vmem:[%s304 + $0xa8] sm:$0xff] %v821
        %854 = vst [vmem:[%s304 + $0xb0] sm:$0xff] %v822
        %855 = vst [vmem:[%s304 + $0xb8] sm:$0xff] %v823
        %856 = vst [vmem:[%s304 + $0xc0] sm:$0xff] %v824
        %857 = vst [vmem:[%s304 + $0xc8] sm:$0xff] %v825
        %858 = vst [vmem:[%s304 + $0xd0] sm:$0xff] %v826
        %859 = vst [vmem:[%s304 + $0xd8] sm:$0xff] %v827
        %860 = vst [vmem:[%s304 + $0xe0] sm:$0xff] %v828
        %861 = vst [vmem:[%s304 + $0xe8] sm:$0xff] %v829
        %862 = vst [vmem:[%s304 + $0xf0] sm:$0xff] %v830
        %863 = vst [vmem:[%s304 + $0xf8] sm:$0xff] %v831
        %s864 = sand.u32 %s138, 1
        %s865 = scalar_lea.sflag [#allocation4], %s864
        %s866 = sand.u32 %s138, 1
        %s867 = smul.addr %s866, 256
        %s868 = scalar_lea.vmem [#allocation8], %s867
        // Predicated region
        $region45: #{tpu_custom_call.1} parent=31 // pred_check
          %p869 = pneg %p148
        $region46: #{tpu_custom_call.1} parent=31 // pred_check_branch
          %871 = sbr.rel (%p869) target = $region48
        $region47: #{tpu_custom_call.1} parent=31 // pred_region
          %s872 = smul.u32 16, %s29
          %s873 = smul.u32 2, %s30
          %875 = vsyncadd %s865, 0
          %s876 = smul.addr %s872, 2
          %s877 = sadd.s32 %s873, %s876
          %s878 = smul.addr %s28, 32
          %s879 = sadd.s32 %s877, %s878
          %s880 = smul.addr %s879, 8
          %s881 = scalar_lea.hbm %s3, %s880
          %s882 = sshll.u32 %s868, 4
          %s883 = int_to_ptr.vmem [resolvable:$true] %s882
          %s884 = sshll.u32 %s881, 4
          %s885 = int_to_ptr.hbm [resolvable:$true] %s884
          %890 = dma.vmem_to_hbm [thread:$0]  %s883, 4096, %s885, %s865, 256, 256, 16
        $region48: #{tpu_custom_call.1} parent=31 // pred_fallthru
          _
      $region32: #{tpu_custom_call.1} parent=5 // pred_fallthru
        _
      %p891 = scmp.le.s32.totalorder 2, %s18
      // Predicated region
      $region49: #{tpu_custom_call.1} parent=5 // pred_check
        %p892 = pneg %p891
      $region50: #{tpu_custom_call.1} parent=5 // pred_check_branch
        %894 = sbr.rel (%p892) target = $region52
      $region51: #{tpu_custom_call.1} parent=5 // pred_region
        %s895 = ssub.s32 %s18, 2
        // Predicated region
        $region53: #{tpu_custom_call.1} parent=51 // pred_check
          %p896 = pneg %p154
        $region54: #{tpu_custom_call.1} parent=51 // pred_check_branch
          %898 = sbr.rel (%p896) target = $region56
        $region55: #{tpu_custom_call.1} parent=51 // pred_region
          %s899 = sand.u32 %s139, 1
          %s900 = scalar_lea.sflag [#allocation4], %s899
          %s901 = sand.u32 %s139, 1
          %s902 = smul.addr %s901, 256
          %s903 = scalar_lea.vmem [#allocation8], %s902
          %905 = dma.done %s900, 4096
        $region56: #{tpu_custom_call.1} parent=51 // pred_fallthru
          _
      $region52: #{tpu_custom_call.1} parent=5 // pred_fallthru
        _
    $region6: #{tpu_custom_call.1} parent=1 // loop_footer
      %s22 = sadd.s32 1, %s18
    $region7: #{tpu_custom_call.1} parent=1 // loop_footer_branch
      %17 = sbr.rel target = $region3
    $region8: #{tpu_custom_call.1} parent=1 // loop_exit
      _
    %906 = vsyncpa [#allocation3], 1
    %s907 = scalar_lea.sflag [#allocation3], 1
    %908 = vsyncpa %s907, 1
    %909 = vsyncpa [#allocation6], 1
    %s910 = scalar_lea.sflag [#allocation6], 1
    %911 = vsyncpa %s910, 1
    %912 = vsyncpa [#allocation4], 1
    %s913 = scalar_lea.sflag [#allocation4], 1
    %914 = vsyncpa %s913, 1

</llo_original>
